<compile_context>
chip_gen: v6e
topology: v6e:2x2x1
jax: 0.10.0
libtpu: 0.0.40
codegen_flags: <defaults>
</compile_context>

<pallas_src>
import jax
import jax.numpy as jnp
from jax import lax
from jax.experimental import pallas as pl
from jax.experimental.pallas import tpu as pltpu


# ------------------------------ Pallas kernel -------------------------------

def _fused_patch_embed_kernel(p_ref, w_ref, pb_ref, o_ref):
    """One (TD, TM) slab of the (B, D, N)-laid-out embedding.

    p_ref:  (TM, K)  patch rows (activations) for this (batch, m-tile)
    w_ref:  (TD, K)  conv weight rows (PyTorch (D, C*P*P) layout, no transpose)
    pb_ref: (TD, TM) fused position-embedding + bias table (reinterpreted order)
    o_ref:  (TD, TM) output slab -> out_bdn[b, di-tile, mi-tile]
    """
    acc = lax.dot_general(
        w_ref[...], p_ref[...],
        dimension_numbers=(((1,), (1,)), ((), ())),   # W @ P^T on the MXU
        preferred_element_type=jnp.float32)            # (TD, TM), f32 accumulate
    o_ref[...] = (acc + pb_ref[...]).astype(o_ref.dtype)


# ------------------------------- tiling utils -------------------------------

def _pick_tile(dim, target, align=128):
    """Largest multiple-of-`align` divisor of `dim` that is <= target, else the
    full dim (a full-extent block is always a legal BlockSpec block)."""
    if dim <= target:
        return dim
    t = (target // align) * align
    while t >= align:
        if dim % t == 0:
            return t
        t -= align
    return dim


# ------------------------------- JAX wrapper ---------------------------------

def fused_patch_embed(patches, w_dk, pos_bias_dn, *, out_dtype=None,
                      tm_target=512, td_target=512):
    """patches: (B, N, K), w_dk: (D, K), pos_bias_dn: (D, N) -> (B, D, N)."""
    B, N, K = patches.shape
    D, K2 = w_dk.shape
    assert K == K2 and pos_bias_dn.shape == (D, N)
    if out_dtype is None:
        out_dtype = pos_bias_dn.dtype

    TM = _pick_tile(N, tm_target)   # patch-row tile (output lane dim)
    TD = _pick_tile(D, td_target)   # hidden tile   (output sublane dim)
    grid = (D // TD, B, N // TM)    # D-tile outermost: weight slab stays resident

    isz = lambda dt: jnp.dtype(dt).itemsize
    block_bytes = (TM * K * isz(patches.dtype) + TD * K * isz(w_dk.dtype)
                   + TD * TM * isz(pos_bias_dn.dtype) + TD * TM * isz(out_dtype))
    # double-buffered blocks + headroom, clamped below v7x's 64 MiB physical VMEM
    vmem_limit = int(min(max(2 * block_bytes + (4 << 20), 16 << 20), 56 << 20))

    cost = pl.CostEstimate(
        flops=2 * B * N * K * D,
        transcendentals=0,
        bytes_accessed=int((D // TD) * B * N * K * isz(patches.dtype)
                           + D * K * isz(w_dk.dtype)
                           + B * D * N * isz(pos_bias_dn.dtype)
                           + B * D * N * isz(out_dtype)),
    )

    return pl.pallas_call(
        _fused_patch_embed_kernel,
        out_shape=jax.ShapeDtypeStruct((B, D, N), out_dtype),
        grid_spec=pltpu.PrefetchScalarGridSpec(
            num_scalar_prefetch=0,
            grid=grid,
            in_specs=[
                pl.BlockSpec((None, TM, K), lambda di, b, mi: (b, mi, 0)),   # patches
                pl.BlockSpec((TD, K),       lambda di, b, mi: (di, 0)),      # weight
                pl.BlockSpec((TD, TM),      lambda di, b, mi: (di, mi)),     # pos+bias
            ],
            out_specs=pl.BlockSpec((None, TD, TM), lambda di, b, mi: (b, di, mi)),
        ),
        compiler_params=pltpu.CompilerParams(
            dimension_semantics=("parallel", "parallel", "parallel"),
            vmem_limit_bytes=vmem_limit,
        ),
        cost_estimate=cost,
    )(patches, w_dk, pos_bias_dn)


def image_processor_forward(x, conv_w, conv_b, pos_emb, patch_size, *,
                            compute_dtype=None):
    """Reproduces ImageProcessor.forward.

    x:       (B, C, H, W)   NCHW, like PyTorch
    conv_w:  (D, C, P, P)   PyTorch Conv2d weight layout
    conv_b:  (D,)           Conv2d bias
    pos_emb: (N, D)         Embedding table, N = (H/P) * (W/P)
    compute_dtype: optional MXU operand dtype (e.g. jnp.bfloat16); accum is f32.
    """
    B, C, H, W = x.shape
    D = conv_w.shape[0]
    P = patch_size
    Hp, Wp = H // P, W // P
    N = Hp * Wp
    K = C * P * P

    # ---- glue: non-overlapping NCHW patches -> (B, N, K) rows in (c,kh,kw) order
    # TODO(synk): this is the one remaining full XLA pass over the input tensor;
    # it could be folded into the kernel with strip-wise (C, P, W) loads, or
    # removed entirely by accepting NHWC inputs upstream.
    patches = x.reshape(B, C, Hp, P, Wp, P)
    patches = patches.transpose(0, 2, 4, 1, 3, 5).reshape(B, N, K)

    w_dk = conv_w.reshape(D, K)            # PyTorch layout is already (D, K)

    if compute_dtype is not None:
        patches = patches.astype(compute_dtype)
        w_dk = w_dk.astype(compute_dtype)

    # Fused epilogue table, in the layout the kernel writes:
    #   out_bdn[b, d, m] = <patches[b, m], w_dk[d]> + conv_b[d] + pos_flat[d*N + m]
    # so that out_bdn.reshape(B, N, D) reproduces PyTorch's
    #   conv(x).reshape(B, -1, D) + pos_emb[None]   element-for-element.
    pos_bias_dn = (pos_emb.reshape(N * D).reshape(D, N)
                   + conv_b[:, None]).astype(jnp.float32)

    out_bdn = fused_patch_embed(patches, w_dk, pos_bias_dn,
                                out_dtype=pos_emb.dtype)        # (B, D, N)
    return out_bdn.reshape(B, N, D)       # free reinterpretation, matches PyTorch


# --------------------------------- reference ---------------------------------

def _reference(x, conv_w, conv_b, pos_emb, patch_size):
    conv_out = lax.conv_general_dilated(
        x, conv_w,
        window_strides=(patch_size, patch_size),
        padding='VALID',
        dimension_numbers=('NCHW', 'OIHW', 'NCHW'),
    ) + conv_b[None, :, None, None]
    B = x.shape[0]
    D = conv_w.shape[0]
    features = conv_out.reshape(B, -1, D)
    return features + pos_emb[None, :, :]


# ----------------------------------- main -------------------------------------

if __name__ == "__main__":
    # Small config: num_channels=4, hidden_size=32, patch_size=4, image_size=16
    B, C, H, W = 2, 4, 16, 16
    P = 4
    D = 32
    N = (H // P) * (W // P)   # 16 patches

    key = jax.random.PRNGKey(0)
    kx, kw, kb, kp = jax.random.split(key, 4)

    x = jax.random.normal(kx, (B, C, H, W), dtype=jnp.float32)
    conv_w = jax.random.normal(kw, (D, C, P, P), dtype=jnp.float32) * 0.05
    conv_b = jax.random.normal(kb, (D,), dtype=jnp.float32) * 0.05
    pos_emb = jax.random.normal(kp, (N, D), dtype=jnp.float32) * 0.02

    ref = _reference(x, conv_w, conv_b, pos_emb, P)

    # f32 path
    out = image_processor_forward(x, conv_w, conv_b, pos_emb, P)
    out = jax.block_until_ready(out)
    assert out.shape == (B, N, D), out.shape
    assert jnp.allclose(out, ref, atol=1e-4, rtol=1e-4), "f32 mismatch vs reference"

    # bf16 MXU-operand path (f32 accumulation) -- looser tolerance
    out_bf16 = image_processor_forward(x, conv_w, conv_b, pos_emb, P,
                                       compute_dtype=jnp.bfloat16)
    out_bf16 = jax.block_until_ready(out_bf16)
    assert jnp.allclose(out_bf16, ref, atol=3e-2, rtol=3e-2), "bf16 mismatch vs reference"

    print("KERNEL_OK")
</pallas_src>

<mosaic_0001>
module attributes {stable_mosaic.version = 11 : i64} {
  func.func @_fused_patch_embed_kernel(%arg0: i32, %arg1: i32, %arg2: i32, %arg3: memref<1x16x64xf32, #tpu.memory_space<vmem>>, %arg4: memref<32x64xf32, #tpu.memory_space<vmem>>, %arg5: memref<32x16xf32, #tpu.memory_space<vmem>>, %arg6: memref<1x32x16xf32, #tpu.memory_space<vmem>>) attributes {dimension_semantics = [#tpu.dimension_semantics<parallel>, #tpu.dimension_semantics<parallel>, #tpu.dimension_semantics<parallel>], iteration_bounds = array<i64: 1, 2, 1>, scalar_prefetch = 0 : i64, scratch_operands = 0 : i64, tpu.core_type = #tpu.core_type<tc>, window_params = [{transform_indices = @transform_0, window_bounds = array<i64: 1, 16, 64>}, {transform_indices = @transform_1, window_bounds = array<i64: 32, 64>}, {transform_indices = @transform_2, window_bounds = array<i64: 32, 16>}, {transform_indices = @transform_3, window_bounds = array<i64: 1, 32, 16>}]} {
    %c0 = arith.constant 0 : index
    %c0_0 = arith.constant 0 : index
    %0 = vector.load %arg4[%c0, %c0_0] : memref<32x64xf32, #tpu.memory_space<vmem>>, vector<32x64xf32>
    %c0_1 = arith.constant 0 : index
    %c0_2 = arith.constant 0 : index
    %c0_3 = arith.constant 0 : index
    %1 = vector.load %arg3[%c0_1, %c0_2, %c0_3] : memref<1x16x64xf32, #tpu.memory_space<vmem>>, vector<1x16x64xf32>
    %2 = vector.shape_cast %1 : vector<1x16x64xf32> to vector<16x64xf32>
    %cst = arith.constant dense<0.000000e+00> : vector<32x16xf32>
    %3 = tpu.matmul %0, %2, %cst {dimension_numbers = #tpu.dot_dimension_numbers<[1], [1], [0], [0], [0, 0, 1, 0], [], []>} : vector<32x64xf32>, vector<16x64xf32>, vector<32x16xf32> -> vector<32x16xf32>
    %c0_4 = arith.constant 0 : index
    %c0_5 = arith.constant 0 : index
    %4 = vector.load %arg5[%c0_4, %c0_5] : memref<32x16xf32, #tpu.memory_space<vmem>>, vector<32x16xf32>
    %5 = arith.addf %3, %4 : vector<32x16xf32>
    %c0_6 = arith.constant 0 : index
    %c0_7 = arith.constant 0 : index
    %c0_8 = arith.constant 0 : index
    %6 = vector.load %arg6[%c0_6, %c0_7, %c0_8] : memref<1x32x16xf32, #tpu.memory_space<vmem>>, vector<1x32x16xf32>
    %7 = vector.shape_cast %6 : vector<1x32x16xf32> to vector<32x16xf32>
    %8 = vector.shape_cast %5 : vector<32x16xf32> to vector<1x32x16xf32>
    tpu.vector_store %arg6[%c0_6, %c0_7, %c0_8], %8 {strides = array<i32>} : memref<1x32x16xf32, #tpu.memory_space<vmem>>, vector<1x32x16xf32>,
    return
  }
  func.func @transform_0(%arg0: i32, %arg1: i32, %arg2: i32) -> (i32, i32, i32) {
    %c0_i32 = arith.constant 0 : i32
    %c0_i32_0 = arith.constant 0 : i32
    return %arg1, %arg2, %c0_i32 : i32, i32, i32
  }
  func.func @transform_1(%arg0: i32, %arg1: i32, %arg2: i32) -> (i32, i32) {
    %c0_i32 = arith.constant 0 : i32
    %c0_i32_0 = arith.constant 0 : i32
    return %arg0, %c0_i32 : i32, i32
  }
  func.func @transform_2(%arg0: i32, %arg1: i32, %arg2: i32) -> (i32, i32) {
    %c0_i32 = arith.constant 0 : i32
    return %arg0, %arg2 : i32, i32
  }
  func.func @transform_3(%arg0: i32, %arg1: i32, %arg2: i32) -> (i32, i32, i32) {
    %c0_i32 = arith.constant 0 : i32
    return %arg1, %arg0, %arg2 : i32, i32, i32
  }
}

</mosaic_0001>

<llo_original>
// kernel: tpu_custom_call.1
$region0: #{tpu_custom_call.1}
  #allocation0 [shape = 'u32[]', space=smem, size = 0x4, offset = 0x4, fixed_abs, tag = 'smem constant byte address 0x4 - core index']
  #allocation1 [shape = 'u32[144,128]{1,0:T(1,128)}', space=vmem, size = 0x12000, scoped, tag = 'internal scratch']
  %s0 = inlined_call_operand.vmem [shape: f32[2,16,64], index: 0, kind: input, shape index: {}]
  %s1 = inlined_call_operand.hbm [shape: f32[32,64], index: 1, kind: input, shape index: {}]
  %s2 = inlined_call_operand.vmem [shape: f32[32,16], index: 2, kind: input, shape index: {}]
  %s3 = inlined_call_operand.vmem [shape: f32[2,32,16], index: 3, kind: output, shape index: {}]
  %s4 = sld [smem:[#allocation0]]
  $region49: #{tpu_custom_call.1} parent=0
    _
  %s6 = ssub.s32 1, %s4
  %s7 = scalar_select 0, %s6, %s4
  $region1: #{tpu_custom_call.1} parent=0
    #allocation2 [shape = 'u8[16384]{0}', space=vmem, size = 0x4000, scoped, tag = 'input window, operand 1, single buffered']
    #allocation3 [shape = 's32[2]{0}', space=sflag, size = 0x8, scoped, tag = 'scoped memory for tpu_custom_call.1']
    %8 = vsyncpa [#allocation3], 0
    loop: start=0, step=1, limit=4
    $region2: #{tpu_custom_call.1} parent=1 // loop_pre_header
      _
    $region3: #{tpu_custom_call.1} parent=1 // loop_header
      %s10 = sphi 0, %s14
      %p11 = scmp.ge.s32.totalorder %s10, 4
      %s17 = sphi 0, %s36
      %s18 = sphi 0, %s32
      %s19 = sphi 0, %s28
      %s20 = sphi 0, %s17
      %s21 = sphi 0, %s18
      %s22 = sphi 0, %s19
      %s23 = sphi 0, %s20
      %s24 = sphi 0, %s21
      %s25 = sphi 0, %s22
      %s41 = sphi 0, %s43
      %s44 = sphi 0, %s41
      %s45 = sphi 0, %s44
      %s61 = sphi 0, %s45
      %s67 = sphi 0, %s69
      %s70 = sphi 0, %s67
      %s71 = sphi 0, %s70
      %s87 = sphi 0, %s71
      %s95 = sphi 0, %s97
      %s98 = sphi 0, %s95
      %s99 = sphi 0, %s98
      %s115 = sphi 0, %s99
      %s125 = sphi 0, %s127
      %s128 = sphi 0, %s125
      %s129 = sphi 0, %s128
      %s145 = sphi 0, %s129
    $region4: #{tpu_custom_call.1} parent=1 // loop_header_branch
      %13 = sbr.rel (%p11) target = $region8
    $region5: #{tpu_custom_call.1} parent=1 // loop_body
      %s15 = ssub.s32 %s10, 1
      %s16 = ssub.s32 %s10, 2
      %s26 = sadd.s32 1, %s19
      %p27 = scmp.ge.s32.totalorder %s26, 1
      %s28 = scalar_select %p27, 0, %s26
      %s29 = sadd.s32 1, %s18
      %s30 = scalar_select %p27, %s29, %s18
      %p31 = scmp.ge.s32.totalorder %s30, 2
      %s32 = scalar_select %p31, 0, %s30
      %s33 = sadd.s32 1, %s17
      %s34 = scalar_select %p31, %s33, %s17
      %p35 = scmp.ge.s32.totalorder %s34, 1
      %s36 = scalar_select %p35, 0, %s34
      %s37 = ssub.s32 %s18, %s32
      %s38 = ssub.s32 %s19, %s28
      %s39 = sor.u32 %s37, %s38
      %p40 = scmp.eq.s32.totalorder %s39, 0
      %s42 = sadd.s32 %s41, 1
      %s43 = scalar_select %p40, %s41, %s42
      %p46 = pneg %p40
      %p47 = scmp.eq.s32.totalorder %s10, 1
      %p48 = por %p46, %p47
      %p49 = scmp.ne.s32.totalorder %s41, %s44
      %p50 = scmp.eq.s32.totalorder %s10, 0
      %p51 = por %p49, %p50
      %p52 = scmp.ne.s32.totalorder %s41, %s44
      %p53 = scmp.eq.s32.totalorder %s15, 1
      %p54 = por %p52, %p53
      %p55 = scmp.ne.s32.totalorder %s44, %s45
      %p56 = scmp.eq.s32.totalorder %s15, 0
      %p57 = por %p55, %p56
      %p58 = scmp.ne.s32.totalorder %s44, %s45
      %p59 = scmp.eq.s32.totalorder %s16, 1
      %p60 = por %p58, %p59
      %p62 = scmp.ne.s32.totalorder %s45, %s61
      %p63 = scmp.eq.s32.totalorder %s16, 0
      %p64 = por %p62, %p63
      %s65 = ssub.s32 %s17, %s36
      %p66 = scmp.eq.s32.totalorder %s65, 0
      %s68 = sadd.s32 %s67, 1
      %s69 = scalar_select %p66, %s67, %s68
      %p72 = pneg %p66
      %p73 = scmp.eq.s32.totalorder %s10, 1
      %p74 = por %p72, %p73
      %p75 = scmp.ne.s32.totalorder %s67, %s70
      %p76 = scmp.eq.s32.totalorder %s10, 0
      %p77 = por %p75, %p76
      %p78 = scmp.ne.s32.totalorder %s67, %s70
      %p79 = scmp.eq.s32.totalorder %s15, 1
      %p80 = por %p78, %p79
      %p81 = scmp.ne.s32.totalorder %s70, %s71
      %p82 = scmp.eq.s32.totalorder %s15, 0
      %p83 = por %p81, %p82
      %p84 = scmp.ne.s32.totalorder %s70, %s71
      %p85 = scmp.eq.s32.totalorder %s16, 1
      %p86 = por %p84, %p85
      %p88 = scmp.ne.s32.totalorder %s71, %s87
      %p89 = scmp.eq.s32.totalorder %s16, 0
      %p90 = por %p88, %p89
      %s91 = ssub.s32 %s17, %s36
      %s92 = ssub.s32 %s19, %s28
      %s93 = sor.u32 %s91, %s92
      %p94 = scmp.eq.s32.totalorder %s93, 0
      %s96 = sadd.s32 %s95, 1
      %s97 = scalar_select %p94, %s95, %s96
      %p100 = pneg %p94
      %p101 = scmp.eq.s32.totalorder %s10, 1
      %p102 = por %p100, %p101
      %p103 = scmp.ne.s32.totalorder %s95, %s98
      %p104 = scmp.eq.s32.totalorder %s10, 0
      %p105 = por %p103, %p104
      %p106 = scmp.ne.s32.totalorder %s95, %s98
      %p107 = scmp.eq.s32.totalorder %s15, 1
      %p108 = por %p106, %p107
      %p109 = scmp.ne.s32.totalorder %s98, %s99
      %p110 = scmp.eq.s32.totalorder %s15, 0
      %p111 = por %p109, %p110
      %p112 = scmp.ne.s32.totalorder %s98, %s99
      %p113 = scmp.eq.s32.totalorder %s16, 1
      %p114 = por %p112, %p113
      %p116 = scmp.ne.s32.totalorder %s99, %s115
      %p117 = scmp.eq.s32.totalorder %s16, 0
      %p118 = por %p116, %p117
      %s119 = ssub.s32 %s18, %s32
      %s120 = ssub.s32 %s17, %s36
      %s121 = sor.u32 %s119, %s120
      %s122 = ssub.s32 %s19, %s28
      %s123 = sor.u32 %s121, %s122
      %p124 = scmp.eq.s32.totalorder %s123, 0
      %s126 = sadd.s32 %s125, 1
      %s127 = scalar_select %p124, %s125, %s126
      %p130 = pneg %p124
      %p131 = scmp.eq.s32.totalorder %s10, 1
      %p132 = por %p130, %p131
      %p133 = scmp.ne.s32.totalorder %s125, %s128
      %p134 = scmp.eq.s32.totalorder %s10, 0
      %p135 = por %p133, %p134
      %p136 = scmp.ne.s32.totalorder %s125, %s128
      %p137 = scmp.eq.s32.totalorder %s15, 1
      %p138 = por %p136, %p137
      %p139 = scmp.ne.s32.totalorder %s128, %s129
      %p140 = scmp.eq.s32.totalorder %s15, 0
      %p141 = por %p139, %p140
      %p142 = scmp.ne.s32.totalorder %s128, %s129
      %p143 = scmp.eq.s32.totalorder %s16, 1
      %p144 = por %p142, %p143
      %p146 = scmp.ne.s32.totalorder %s129, %s145
      %p147 = scmp.eq.s32.totalorder %s16, 0
      %p148 = por %p146, %p147
      %p149 = scmp.le.s32.totalorder 1, %s10
      %p150 = scmp.lt.s32.totalorder %s10, 3
      %p151 = pnand %p149, %p150
      %p152 = pneg %p151
      // Predicated region
      $region9: #{tpu_custom_call.1} parent=5 // pred_check
        _
      $region10: #{tpu_custom_call.1} parent=5 // pred_check_branch
        %154 = sbr.rel (%p151) target = $region12
      $region11: #{tpu_custom_call.1} parent=5 // pred_region
        %s155 = ssub.s32 %s10, 1
        // Predicated region
        $region13: #{tpu_custom_call.1} parent=11 // pred_check
          %p156 = pneg %p83
        $region14: #{tpu_custom_call.1} parent=11 // pred_check_branch
          %158 = sbr.rel (%p156) target = $region16
        $region15: #{tpu_custom_call.1} parent=11 // pred_region
          %s159 = smul.u32 4, %s20
          %s161 = ssub.s32 512, 512
          %162 = vsyncadd [#allocation3], %s161
          %s163 = smul.addr %s159, 128
          %s164 = scalar_lea.hbm %s1, %s163
          %s165 = sshll.u32 [#allocation2], 4
          %s166 = int_to_ptr.vmem [resolvable:$true] %s165
          %171 = dma.hbm_to_vmem [thread:$0]  %s164, 512, %s166, [#allocation3], 128, 128, 8
        $region16: #{tpu_custom_call.1} parent=11 // pred_fallthru
          _
        // Predicated region
        $region17: #{tpu_custom_call.1} parent=11 // pred_check
          %p172 = pneg %p111
        $region18: #{tpu_custom_call.1} parent=11 // pred_check_branch
          %174 = sbr.rel (%p172) target = $region20
        $region19: #{tpu_custom_call.1} parent=11 // pred_region
          %s175 = smul.u32 4, %s20
          %p176 = scmp.lt.s32.totalorder %s175, 3
          %s177 = scalar_select %p176, %s175, 3
          %p178 = scmp.lt.s32.totalorder %s22, 0
          %s179 = scalar_select %p178, %s22, 0
          %s180 = sadd.s32 %s179, %s177
          %s181 = smul.addr %s180, 8
          %s182 = scalar_lea.vmem %s2, %s181
          %s183 = smul.u32 4, %s20
        $region20: #{tpu_custom_call.1} parent=11 // pred_fallthru
          _
      $region12: #{tpu_custom_call.1} parent=5 // pred_fallthru
        _
      %p184 = scmp.lt.s32.totalorder %s10, 2
      // Predicated region
      $region21: #{tpu_custom_call.1} parent=5 // pred_check
        %p185 = pneg %p184
      $region22: #{tpu_custom_call.1} parent=5 // pred_check_branch
        %187 = sbr.rel (%p185) target = $region24
      $region23: #{tpu_custom_call.1} parent=5 // pred_region
        // Predicated region
        $region25: #{tpu_custom_call.1} parent=23 // pred_check
          %p188 = pneg %p51
        $region26: #{tpu_custom_call.1} parent=23 // pred_check_branch
          %190 = sbr.rel (%p188) target = $region28
        $region27: #{tpu_custom_call.1} parent=23 // pred_region
          %s191 = smul.u32 2, %s19
          %p192 = scmp.lt.s32.totalorder %s18, 1
          %s193 = scalar_select %p192, %s18, 1
          %p194 = scmp.lt.s32.totalorder %s191, 1
          %s195 = scalar_select %p194, %s191, 1
          %s196 = smul.addr %s193, 2
          %s197 = sadd.s32 %s195, %s196
          %s198 = smul.addr %s197, 8
          %s199 = scalar_lea.vmem %s0, %s198
          %s200 = smul.u32 2, %s19
        $region28: #{tpu_custom_call.1} parent=23 // pred_fallthru
          _
      $region24: #{tpu_custom_call.1} parent=5 // pred_fallthru
        _
      %p201 = scmp.le.s32.totalorder 1, %s10
      %p202 = scmp.lt.s32.totalorder %s10, 3
      %p203 = pnand %p201, %p202
      %p204 = pneg %p203
      // Predicated region
      $region29: #{tpu_custom_call.1} parent=5 // pred_check
        _
      $region30: #{tpu_custom_call.1} parent=5 // pred_check_branch
        %206 = sbr.rel (%p203) target = $region32
      $region31: #{tpu_custom_call.1} parent=5 // pred_region
        %s207 = ssub.s32 %s10, 1
        // Predicated region
        $region33: #{tpu_custom_call.1} parent=31 // pred_check
          %p208 = pneg %p83
        $region34: #{tpu_custom_call.1} parent=31 // pred_check_branch
          %210 = sbr.rel (%p208) target = $region36
        $region35: #{tpu_custom_call.1} parent=31 // pred_region
          %211 = dma.done [#allocation3], 512
        $region36: #{tpu_custom_call.1} parent=31 // pred_fallthru
          _
        %s212 = smul.u32 2, %s22
        %p213 = scmp.lt.s32.totalorder %s21, 1
        %s214 = scalar_select %p213, %s21, 1
        %p215 = scmp.lt.s32.totalorder %s212, 1
        %s216 = scalar_select %p215, %s212, 1
        %s217 = smul.addr %s214, 2
        %s218 = sadd.s32 %s216, %s217
        %s219 = smul.addr %s218, 8
        %s220 = scalar_lea.vmem %s0, %s219
        %p221 = pneg %p57
        %p222 = pneg %p54
        %p223 = pneg %p83
        %p224 = pneg %p80
        %s225 = smul.u32 4, %s20
        %p226 = scmp.lt.s32.totalorder %s225, 3
        %s227 = scalar_select %p226, %s225, 3
        %p228 = scmp.lt.s32.totalorder %s22, 0
        %s229 = scalar_select %p228, %s22, 0
        %s230 = sadd.s32 %s229, %s227
        %s231 = smul.addr %s230, 8
        %s232 = scalar_lea.vmem %s2, %s231
        %p233 = pneg %p111
        %p234 = pneg %p108
        %p235 = pneg %p141
        %p236 = pneg %p138
        %s237 = smul.u32 4, %s20
        %p238 = scmp.lt.s32.totalorder %s21, 1
        %s239 = scalar_select %p238, %s21, 1
        %p240 = scmp.lt.s32.totalorder %s237, 3
        %s241 = scalar_select %p240, %s237, 3
        %p242 = scmp.lt.s32.totalorder %s22, 0
        %s243 = scalar_select %p242, %s22, 0
        %s244 = sadd.s32 %s243, %s241
        %s245 = smul.addr %s239, 4
        %s246 = sadd.s32 %s244, %s245
        %s247 = smul.addr %s246, 8
        %s248 = scalar_lea.vmem %s3, %s247
        %s249 = smul.u32 2, %s22
        %p250 = scmp.lt.s32.totalorder %s21, 1
        %s251 = scalar_select %p250, %s21, 1
        %p252 = scmp.lt.s32.totalorder %s249, 1
        %s253 = scalar_select %p252, %s249, 1
        %s254 = smul.addr %s251, 2
        %s255 = sadd.s32 %s253, %s254
        %s256 = smul.addr %s255, 8
        %s257 = scalar_lea.vmem %s0, %s256
        %s258 = smul.u32 2, %s22
        %s259 = smul.u32 4, %s20
        %s260 = smul.u32 4, %s20
        %p261 = scmp.lt.s32.totalorder %s260, 3
        %s262 = scalar_select %p261, %s260, 3
        %p263 = scmp.lt.s32.totalorder %s22, 0
        %s264 = scalar_select %p263, %s22, 0
        %s265 = sadd.s32 %s264, %s262
        %s266 = smul.addr %s265, 8
        %s267 = scalar_lea.vmem %s2, %s266
        %s268 = smul.u32 4, %s20
        %s269 = smul.u32 4, %s20
        %p270 = scmp.lt.s32.totalorder %s21, 1
        %s271 = scalar_select %p270, %s21, 1
        %p272 = scmp.lt.s32.totalorder %s269, 3
        %s273 = scalar_select %p272, %s269, 3
        %p274 = scmp.lt.s32.totalorder %s22, 0
        %s275 = scalar_select %p274, %s22, 0
        %s276 = sadd.s32 %s275, %s273
        %s277 = smul.addr %s271, 4
        %s278 = sadd.s32 %s276, %s277
        %s279 = smul.addr %s278, 8
        %s280 = scalar_lea.vmem %s3, %s279
        %s281 = smul.u32 4, %s20
        %v282 = vld [vmem:[#allocation2] sm:$0xff]
        %v283 = vld [vmem:[#allocation2 + $0x8] sm:$0xff]
        %v284 = vld [vmem:[#allocation2 + $0x10] sm:$0xff]
        %v285 = vld [vmem:[#allocation2 + $0x18] sm:$0xff]
        %v286 = vld [vmem:[%s257] sm:$0xff]
        %v287 = vld [vmem:[%s257 + $0x8] sm:$0xff]
        %v288 = vld [vmem:[%s267] sm:$0xff]
        %v289 = vld [vmem:[%s267 + $0x8] sm:$0xff]
        %v290 = vld [vmem:[%s267 + $0x10] sm:$0xff]
        %v291 = vld [vmem:[%s267 + $0x18] sm:$0xff]
        %vm292 = vcmask 523264
        %v294 = vsel %vm292, %v282, 0
        %v297 = vsel %vm292, %v283, 0
        %v300 = vsel %vm292, %v284, 0
        %v303 = vsel %vm292, %v285, 0
        %v306 = vsel %vm292, %v286, 0
        %v309 = vsel %vm292, %v287, 0
        %311 = vmatprep.subr.mxu0 0.0
        %312 = vmatpush1.xpose.msra.mxu0 0.0
        %313 = vmatprep.subr.mxu0 0.0
        %314 = vmatpush1.xpose.msra.mxu0 0.0
        %315 = vmatprep.subr.mxu0 0.0
        %316 = vmatpush1.xpose.msra.mxu0 0.0
        %317 = vmatprep.subr.mxu0 0.0
        %318 = vmatpush1.xpose.msra.mxu0 0.0
        %319 = vmatprep.subr.mxu0 0.0
        %320 = vmatpush1.xpose.msra.mxu0 0.0
        %321 = vmatprep.subr.mxu0 0.0
        %322 = vmatpush1.xpose.msra.mxu0 0.0
        %323 = vmatprep.subr.mxu0 0.0
        %324 = vmatpush1.xpose.msra.mxu0 0.0
        %325 = vmatprep.subr.mxu0 0.0
        %326 = vmatpush1.xpose.msra.mxu0 0.0
        %327 = vmatprep.subr.mxu0 0.0
        %328 = vmatpush1.xpose.msra.mxu0 0.0
        %329 = vmatprep.subr.mxu0 0.0
        %330 = vmatpush1.xpose.msra.mxu0 0.0
        %331 = vmatprep.subr.mxu0 0.0
        %332 = vmatpush1.xpose.msra.mxu0 0.0
        %333 = vmatprep.subr.mxu0 0.0
        %334 = vmatpush1.xpose.msra.mxu0 0.0
        %335 = vmatprep.subr.mxu0 0.0
        %336 = vmatpush1.xpose.msra.mxu0 0.0
        %337 = vmatprep.subr.mxu0 0.0
        %338 = vmatpush1.xpose.msra.mxu0 0.0
        %339 = vmatprep.subr.mxu0 0.0
        %340 = vmatpush1.xpose.msra.mxu0 %v309
        %341 = vmatprep.subr.mxu0 0.0
        %342 = vmatpush1.xpose.msra.mxu0 %v306
        %343 = vmatprep.subr.mxu0 0.0
        %344 = vmatpush2.xpose.msra.mxu0 0.0
        %345 = vmatprep.subr.mxu0 0.0
        %346 = vmatpush2.xpose.msra.mxu0 0.0
        %347 = vmatprep.subr.mxu0 0.0
        %348 = vmatpush2.xpose.msra.mxu0 0.0
        %349 = vmatprep.subr.mxu0 0.0
        %350 = vmatpush2.xpose.msra.mxu0 0.0
        %351 = vmatprep.subr.mxu0 0.0
        %352 = vmatpush2.xpose.msra.mxu0 0.0
        %353 = vmatprep.subr.mxu0 0.0
        %354 = vmatpush2.xpose.msra.mxu0 0.0
        %355 = vmatprep.subr.mxu0 0.0
        %356 = vmatpush2.xpose.msra.mxu0 0.0
        %357 = vmatprep.subr.mxu0 0.0
        %358 = vmatpush2.xpose.msra.mxu0 0.0
        %359 = vmatprep.subr.mxu0 0.0
        %360 = vmatpush2.xpose.msra.mxu0 0.0
        %361 = vmatprep.subr.mxu0 0.0
        %362 = vmatpush2.xpose.msra.mxu0 0.0
        %363 = vmatprep.subr.mxu0 0.0
        %364 = vmatpush2.xpose.msra.mxu0 0.0
        %365 = vmatprep.subr.mxu0 0.0
        %366 = vmatpush2.xpose.msra.mxu0 0.0
        %367 = vmatprep.subr.mxu0 0.0
        %368 = vmatpush2.xpose.msra.mxu0 0.0
        %369 = vmatprep.subr.mxu0 0.0
        %370 = vmatpush2.xpose.msra.mxu0 0.0
        %371 = vmatprep.subr.mxu0 0.0
        %372 = vmatpush2.xpose.msra.mxu0 0.0
        %373 = vmatprep.subr.mxu0 0.0
        %374 = vmatpush2.xpose.msra.mxu0 0.0
        %375 = vmatprep.mubr.f32.mxu0 0.0
        %376 = vmatmul.mubr.f32.gmra.mxu0 %v294
        %v377 = vpop.f32.mrf.mxu0
        %v378 = vadd.f32 %v288, %v377
        %v379 = vpop.f32.mrf.mxu0
        %380 = vmatprep.mubr.f32.mxu0 0.0
        %381 = vmatmul.mubr.f32.gmra.mxu0 %v297
        %v382 = vpop.f32.mrf.mxu0
        %v383 = vadd.f32 %v289, %v382
        %v384 = vpop.f32.mrf.mxu0
        %385 = vmatprep.mubr.f32.mxu0 0.0
        %386 = vmatmul.mubr.f32.gmra.mxu0 %v300
        %v387 = vpop.f32.mrf.mxu0
        %v388 = vadd.f32 %v290, %v387
        %v389 = vpop.f32.mrf.mxu0
        %390 = vmatprep.mubr.f32.mxu0 0.0
        %391 = vmatmul.mubr.f32.gmra.mxu0 %v303
        %v392 = vpop.f32.mrf.mxu0
        %v393 = vadd.f32 %v291, %v392
        %v394 = vpop.f32.mrf.mxu0
        %395 = vdwg.mxu0
        %vm396 = vcmask 130048
        %397 = vst.msk [vmem:[%s280] sm:$0xff] %vm396, %v378
        %398 = vst.msk [vmem:[%s280 + $0x8] sm:$0xff] %vm396, %v383
        %399 = vst.msk [vmem:[%s280 + $0x10] sm:$0xff] %vm396, %v388
        %400 = vst.msk [vmem:[%s280 + $0x18] sm:$0xff] %vm396, %v393
        %s401 = smul.u32 4, %s20
        %p402 = scmp.lt.s32.totalorder %s21, 1
        %s403 = scalar_select %p402, %s21, 1
        %p404 = scmp.lt.s32.totalorder %s401, 3
        %s405 = scalar_select %p404, %s401, 3
        %p406 = scmp.lt.s32.totalorder %s22, 0
        %s407 = scalar_select %p406, %s22, 0
        %s408 = sadd.s32 %s407, %s405
        %s409 = smul.addr %s403, 4
        %s410 = sadd.s32 %s408, %s409
        %s411 = smul.addr %s410, 8
        %s412 = scalar_lea.vmem %s3, %s411
        // Predicated region
        $region37: #{tpu_custom_call.1} parent=31 // pred_check
          %p413 = pneg %p138
        $region38: #{tpu_custom_call.1} parent=31 // pred_check_branch
          %415 = sbr.rel (%p413) target = $region40
        $region39: #{tpu_custom_call.1} parent=31 // pred_region
          %s416 = smul.u32 4, %s20
        $region40: #{tpu_custom_call.1} parent=31 // pred_fallthru
          _
      $region32: #{tpu_custom_call.1} parent=5 // pred_fallthru
        _
      %p417 = scmp.le.s32.totalorder 2, %s10
      // Predicated region
      $region41: #{tpu_custom_call.1} parent=5 // pred_check
        %p418 = pneg %p417
      $region42: #{tpu_custom_call.1} parent=5 // pred_check_branch
        %420 = sbr.rel (%p418) target = $region44
      $region43: #{tpu_custom_call.1} parent=5 // pred_region
        %s421 = ssub.s32 %s10, 2
        // Predicated region
        $region45: #{tpu_custom_call.1} parent=43 // pred_check
          %p422 = pneg %p144
        $region46: #{tpu_custom_call.1} parent=43 // pred_check_branch
          %424 = sbr.rel (%p422) target = $region48
        $region47: #{tpu_custom_call.1} parent=43 // pred_region
          %s425 = smul.u32 4, %s23
          %p426 = scmp.lt.s32.totalorder %s24, 1
          %s427 = scalar_select %p426, %s24, 1
          %p428 = scmp.lt.s32.totalorder %s425, 3
          %s429 = scalar_select %p428, %s425, 3
          %p430 = scmp.lt.s32.totalorder %s25, 0
          %s431 = scalar_select %p430, %s25, 0
          %s432 = sadd.s32 %s431, %s429
          %s433 = smul.addr %s427, 4
          %s434 = sadd.s32 %s432, %s433
          %s435 = smul.addr %s434, 8
          %s436 = scalar_lea.vmem %s3, %s435
        $region48: #{tpu_custom_call.1} parent=43 // pred_fallthru
          _
      $region44: #{tpu_custom_call.1} parent=5 // pred_fallthru
        _
    $region6: #{tpu_custom_call.1} parent=1 // loop_footer
      %s14 = sadd.s32 1, %s10
    $region7: #{tpu_custom_call.1} parent=1 // loop_footer_branch
      %9 = sbr.rel target = $region3
    $region8: #{tpu_custom_call.1} parent=1 // loop_exit
      _
    %437 = vsyncpa [#allocation3], 1
    %s438 = scalar_lea.sflag [#allocation3], 1
    %439 = vsyncpa %s438, 1

</llo_original>
